<compile_context>
chip_gen: v7x
topology: tpu7x:2x2x1
jax: 0.10.0
libtpu: 0.0.40
codegen_flags: <defaults>
</compile_context>

<pallas_src>
import functools

import numpy as np
import jax
import jax.numpy as jnp
from jax.experimental import pallas as pl
from jax.experimental.pallas import tpu as pltpu


def _round_up(x, m):
    return ((x + m - 1) // m) * m


# ----------------------------------------------------------------------------
# Graph construction glue (mirrors getSparseGraph / norm_adj_single, but dense)
# ----------------------------------------------------------------------------
def build_norm_adj(train_data, num_users, num_items):
    n = num_users + num_items
    adj = np.zeros((n, n), dtype=np.float32)
    for (u, i) in train_data:
        adj[u, num_users + i] = 1.0
        adj[num_users + i, u] = 1.0
    rowsum = adj.sum(axis=1)
    with np.errstate(divide="ignore"):
        d_inv = np.power(rowsum, -0.5)
    d_inv[np.isinf(d_inv)] = 0.0
    norm_adj = d_inv[:, None] * adj * d_inv[None, :]
    return jnp.asarray(norm_adj, dtype=jnp.float32)
    # TODO(synk): real LightGCN adjacencies are >99% sparse; a CSR/scalar-prefetch
    # row-block formulation would cut HBM bytes per layer by the sparsity factor.


def _choose_prop_tiles(n):
    """Tile sizes for the (N_pad, N_pad) @ (N_pad, D) layer matmul.

    Sized against v7x's 64 MiB per-TC VMEM (safe on v5e/v6e as well):
    tm=512, tk=1024 bf16 A tile ~1 MiB, double-buffered ~2 MiB total live.
    """
    if n <= 512:
        t = _round_up(n, 128)
        return t, t, t                     # tm, tk, n_pad (single block)
    tm = 512
    tk = 1024 if n >= 2048 else 512
    n_pad = _round_up(n, max(tm, tk))      # divisible by both tm and tk
    return tm, tk, n_pad


def prepare_graph(norm_adj, num_users, num_items):
    """Pad the normalized adjacency and cast to bf16 once (model-build time)."""
    n = num_users + num_items
    _, _, n_pad = _choose_prop_tiles(n)
    adj = norm_adj
    if n_pad != n:
        adj = jnp.pad(adj, ((0, n_pad - n), (0, n_pad - n)))
    return adj.astype(jnp.bfloat16)        # streamed bf16: halves A's HBM traffic


# ----------------------------------------------------------------------------
# Kernel 1: one LightGCN propagation layer  E_out = A @ E_in  (tiled matmul)
# ----------------------------------------------------------------------------
def _prop_layer_kernel(a_ref, e_ref, o_ref, acc_ref):
    # grid = (row_tiles, k_tiles); k (contraction) is the last, "arbitrary" axis.
    @pl.when(pl.program_id(1) == 0)
    def _():
        acc_ref[...] = jnp.zeros_like(acc_ref)

    # bf16 x bf16 on the MXU, f32 accumulation (accumulator scratch stays f32;
    # all elementwise work in this kernel is f32 — v5e has no bf16 VPU path).
    acc_ref[...] += jnp.dot(a_ref[...], e_ref[...],
                            preferred_element_type=jnp.float32)

    @pl.when(pl.program_id(1) == pl.num_programs(1) - 1)
    def _():
        o_ref[...] = acc_ref[...]


def lgcn_propagate_layer(adj_bf16, e_bf16, tm, tk):
    n_pad, d = e_bf16.shape
    grid = (n_pad // tm, n_pad // tk)
    return pl.pallas_call(
        _prop_layer_kernel,
        out_shape=jax.ShapeDtypeStruct((n_pad, d), jnp.float32),
        grid=grid,
        in_specs=[
            # A tile: dominant HBM stream; default double-buffering is enough at
            # these tile sizes (deepen with pipeline_mode=pl.Buffered(3) if
            # profiling still shows exposed DMA).
            pl.BlockSpec((tm, tk), lambda i, k: (i, k)),
            pl.BlockSpec((tk, d), lambda i, k: (k, 0)),
        ],
        out_specs=pl.BlockSpec((tm, d), lambda i, k: (i, 0)),
        scratch_shapes=[pltpu.VMEM((tm, d), jnp.float32)],
        compiler_params=pltpu.CompilerParams(
            # row axis shards across v7x's 2 TensorCores; K is the reduction.
            dimension_semantics=("parallel", "arbitrary"),
            vmem_limit_bytes=32 * 1024 * 1024,   # well within v7x's 64 MiB VMEM
        ),
    )(adj_bf16, e_bf16)


# ----------------------------------------------------------------------------
# Kernel 2: BPR-style score difference, batch on the lane axis (dense stores)
# ----------------------------------------------------------------------------
def _score_kernel(u_ref, p_ref, n_ref, out_ref):
    # refs: (D, tb) f32 ; out: (1, tb) f32 — lane-dense, unmasked stores.
    diff = u_ref[...] * (p_ref[...] - n_ref[...])
    out_ref[...] = jnp.sum(diff, axis=0, keepdims=True)


def score_diff(users_emb, pos_emb, neg_emb):
    b, d = users_emb.shape
    if b <= 512:
        b_pad = _round_up(b, 128)
        tb = b_pad
    else:
        tb = 512
        b_pad = _round_up(b, tb)

    def to_lane_major(x):
        xt = x.T                                  # (D, B): batch on lanes
        if b_pad != b:
            xt = jnp.pad(xt, ((0, 0), (0, b_pad - b)))
        return xt

    u_t, p_t, n_t = (to_lane_major(x) for x in (users_emb, pos_emb, neg_emb))

    out = pl.pallas_call(
        _score_kernel,
        out_shape=jax.ShapeDtypeStruct((1, b_pad), jnp.float32),
        grid=(b_pad // tb,),
        in_specs=[pl.BlockSpec((d, tb), lambda i: (0, i)) for _ in range(3)],
        out_specs=pl.BlockSpec((1, tb), lambda i: (0, i)),
        compiler_params=pltpu.CompilerParams(
            dimension_semantics=("parallel",)),
    )(u_t, p_t, n_t)
    return out[0, :b]                             # (B,)


# ----------------------------------------------------------------------------
# Full LGCN forward (matches LGCN.forward semantics)
# ----------------------------------------------------------------------------
@functools.partial(jax.jit, static_argnums=(3,))
def lgcn_forward(user_emb_table, item_emb_table, adj_bf16, num_layers,
                 users, pos_items, neg_items):
    num_users, d = user_emb_table.shape
    num_items = item_emb_table.shape[0]
    n = num_users + num_items

    tm, tk, n_pad = _choose_prop_tiles(n)
    assert adj_bf16.shape == (n_pad, n_pad)

    # computer_ui(): propagate + mean over layers
    all_emb = jnp.concatenate([user_emb_table, item_emb_table], axis=0)
    e = jnp.pad(all_emb, ((0, n_pad - n), (0, 0))) if n_pad != n else all_emb

    acc = e                                       # f32 layer-0 term of the mean
    cur = e
    for _ in range(num_layers):                   # layer dep -> one call per layer
        cur = lgcn_propagate_layer(adj_bf16, cur.astype(jnp.bfloat16), tm, tk)
        acc = acc + cur                           # f32 accumulation of the mean
    light_out = acc * (1.0 / float(num_layers + 1))

    all_users = light_out[:num_users]
    all_items = light_out[num_users:num_users + num_items]

    # TODO(synk): the three gathers could be fused into the score kernel via
    # PrefetchScalarGridSpec row gathers; left to XLA — minor vs the A@E layers.
    users_emb = jnp.take(all_users, users, axis=0)
    pos_emb = jnp.take(all_items, pos_items, axis=0)
    neg_emb = jnp.take(all_items, neg_items, axis=0)

    # pos_scores - neg_scores (Pallas kernel 2)
    return score_diff(users_emb, pos_emb, neg_emb)


# ----------------------------------------------------------------------------
# Pure-JAX reference (mirrors the kernels' bf16 streaming of A and layer inputs)
# ----------------------------------------------------------------------------
def lgcn_forward_ref(user_emb_table, item_emb_table, norm_adj, num_layers,
                     users, pos_items, neg_items):
    num_users = user_emb_table.shape[0]
    all_emb = jnp.concatenate([user_emb_table, item_emb_table], axis=0)
    a_q = norm_adj.astype(jnp.bfloat16).astype(jnp.float32)
    embs = [all_emb]
    cur = all_emb
    for _ in range(num_layers):
        cur_q = cur.astype(jnp.bfloat16).astype(jnp.float32)
        cur = a_q @ cur_q
        embs.append(cur)
    light_out = jnp.mean(jnp.stack(embs, axis=1), axis=1)
    all_users = light_out[:num_users]
    all_items = light_out[num_users:]
    u = jnp.take(all_users, users, axis=0)
    p = jnp.take(all_items, pos_items, axis=0)
    n = jnp.take(all_items, neg_items, axis=0)
    return jnp.sum(u * p, axis=1) - jnp.sum(u * n, axis=1)


if __name__ == "__main__":
    # Small deterministic config
    num_users = 8
    num_items = 8
    embedding_size = 32
    num_layers = 2
    batch = 8

    # Synthetic train_data: each user interacts with 2 items (deterministic)
    train_data = [(u, (u + k) % num_items) for u in range(num_users) for k in (0, 3)]
    norm_adj = build_norm_adj(train_data, num_users, num_items)
    adj_bf16 = prepare_graph(norm_adj, num_users, num_items)   # built once (like __init__)

    # Deterministic parameter init: N(0, 0.01) like nn.init.normal_
    key = jax.random.PRNGKey(0)
    k_u, k_i, _ = jax.random.split(key, 3)
    user_emb_table = 0.01 * jax.random.normal(
        k_u, (num_users, embedding_size), dtype=jnp.float32)
    item_emb_table = 0.01 * jax.random.normal(
        k_i, (num_items, embedding_size), dtype=jnp.float32)

    # Deterministic batch indices
    users = jnp.arange(batch, dtype=jnp.int32) % num_users
    pos_items = jnp.arange(batch, dtype=jnp.int32) % num_items
    neg_items = (jnp.arange(batch, dtype=jnp.int32) + 5) % num_items

    out = lgcn_forward(user_emb_table, item_emb_table, adj_bf16, num_layers,
                       users, pos_items, neg_items)
    out = jax.block_until_ready(out)

    ref = lgcn_forward_ref(user_emb_table, item_emb_table, norm_adj, num_layers,
                           users, pos_items, neg_items)
    np.testing.assert_allclose(np.asarray(out), np.asarray(ref),
                               rtol=1e-3, atol=1e-6)

    print("KERNEL_OK")
</pallas_src>

<mosaic_0001>
module attributes {stable_mosaic.version = 11 : i64} {
  func.func @_prop_layer_kernel(%arg0: i32, %arg1: i32, %arg2: memref<128x128xbf16, #tpu.memory_space<vmem>>, %arg3: memref<128x32xbf16, #tpu.memory_space<vmem>>, %arg4: memref<128x32xf32, #tpu.memory_space<vmem>>, %arg5: memref<128x32xf32, #tpu.memory_space<vmem>>) attributes {dimension_semantics = [#tpu.dimension_semantics<parallel>, #tpu.dimension_semantics<arbitrary>], iteration_bounds = array<i64: 1, 1>, scalar_prefetch = 0 : i64, scratch_operands = 1 : i64, tpu.core_type = #tpu.core_type<tc>, window_params = [{transform_indices = @transform_0, window_bounds = array<i64: 128, 128>}, {transform_indices = @transform_1, window_bounds = array<i64: 128, 32>}, {transform_indices = @transform_2, window_bounds = array<i64: 128, 32>}]} {
    %c0_i32 = arith.constant 0 : i32
    %0 = arith.cmpi eq, %arg1, %c0_i32 : i32
    %1 = arith.extui %0 : i1 to i32
    %c0_i32_0 = arith.constant 0 : i32
    %2 = arith.cmpi ne, %1, %c0_i32_0 : i32
    scf.if %2 {
      %cst_10 = arith.constant 0.000000e+00 : f32
      %12 = vector.broadcast %cst_10 : f32 to vector<128x32xf32>
      %c0_11 = arith.constant 0 : index
      %c0_12 = arith.constant 0 : index
      %13 = vector.load %arg5[%c0_11, %c0_12] : memref<128x32xf32, #tpu.memory_space<vmem>>, vector<128x32xf32>
      tpu.vector_store %arg5[%c0_11, %c0_12], %12 {strides = array<i32>} : memref<128x32xf32, #tpu.memory_space<vmem>>, vector<128x32xf32>,
    } else {
    }
    %c0 = arith.constant 0 : index
    %c0_1 = arith.constant 0 : index
    %3 = vector.load %arg5[%c0, %c0_1] : memref<128x32xf32, #tpu.memory_space<vmem>>, vector<128x32xf32>
    %c0_2 = arith.constant 0 : index
    %c0_3 = arith.constant 0 : index
    %4 = vector.load %arg2[%c0_2, %c0_3] : memref<128x128xbf16, #tpu.memory_space<vmem>>, vector<128x128xbf16>
    %c0_4 = arith.constant 0 : index
    %c0_5 = arith.constant 0 : index
    %5 = vector.load %arg3[%c0_4, %c0_5] : memref<128x32xbf16, #tpu.memory_space<vmem>>, vector<128x32xbf16>
    %cst = arith.constant dense<0.000000e+00> : vector<128x32xf32>
    %6 = tpu.matmul %4, %5, %cst {dimension_numbers = #tpu.dot_dimension_numbers<[1], [0], [0], [1], [0, 0, 1, 1], [], []>} : vector<128x128xbf16>, vector<128x32xbf16>, vector<128x32xf32> -> vector<128x32xf32>
    %7 = arith.addf %3, %6 : vector<128x32xf32>
    %c0_6 = arith.constant 0 : index
    %c0_7 = arith.constant 0 : index
    %8 = vector.load %arg5[%c0_6, %c0_7] : memref<128x32xf32, #tpu.memory_space<vmem>>, vector<128x32xf32>
    tpu.vector_store %arg5[%c0_6, %c0_7], %7 {strides = array<i32>} : memref<128x32xf32, #tpu.memory_space<vmem>>, vector<128x32xf32>,
    %c0_i32_8 = arith.constant 0 : i32
    %9 = arith.cmpi eq, %arg1, %c0_i32_8 : i32
    %10 = arith.extui %9 : i1 to i32
    %c0_i32_9 = arith.constant 0 : i32
    %11 = arith.cmpi ne, %10, %c0_i32_9 : i32
    scf.if %11 {
      %c0_10 = arith.constant 0 : index
      %c0_11 = arith.constant 0 : index
      %12 = vector.load %arg5[%c0_10, %c0_11] : memref<128x32xf32, #tpu.memory_space<vmem>>, vector<128x32xf32>
      %c0_12 = arith.constant 0 : index
      %c0_13 = arith.constant 0 : index
      %13 = vector.load %arg4[%c0_12, %c0_13] : memref<128x32xf32, #tpu.memory_space<vmem>>, vector<128x32xf32>
      tpu.vector_store %arg4[%c0_12, %c0_13], %12 {strides = array<i32>} : memref<128x32xf32, #tpu.memory_space<vmem>>, vector<128x32xf32>,
    } else {
    }
    return
  }
  func.func @transform_0(%arg0: i32, %arg1: i32) -> (i32, i32) {
    %c0_i32 = arith.constant 0 : i32
    return %arg0, %arg1 : i32, i32
  }
  func.func @transform_1(%arg0: i32, %arg1: i32) -> (i32, i32) {
    %c0_i32 = arith.constant 0 : i32
    %c0_i32_0 = arith.constant 0 : i32
    return %arg1, %c0_i32 : i32, i32
  }
  func.func @transform_2(%arg0: i32, %arg1: i32) -> (i32, i32) {
    %c0_i32 = arith.constant 0 : i32
    %c0_i32_0 = arith.constant 0 : i32
    return %arg0, %c0_i32 : i32, i32
  }
}

module attributes {stable_mosaic.version = 11 : i64} {
  func.func @_score_kernel(%arg0: i32, %arg1: memref<32x128xf32, #tpu.memory_space<vmem>>, %arg2: memref<32x128xf32, #tpu.memory_space<vmem>>, %arg3: memref<32x128xf32, #tpu.memory_space<vmem>>, %arg4: memref<1x128xf32, #tpu.memory_space<vmem>>) attributes {dimension_semantics = [#tpu.dimension_semantics<parallel>], iteration_bounds = array<i64: 1>, scalar_prefetch = 0 : i64, scratch_operands = 0 : i64, tpu.core_type = #tpu.core_type<tc>, window_params = [{transform_indices = @transform_0, window_bounds = array<i64: 32, 128>}, {transform_indices = @transform_1, window_bounds = array<i64: 32, 128>}, {transform_indices = @transform_2, window_bounds = array<i64: 32, 128>}, {transform_indices = @transform_3, window_bounds = array<i64: 1, 128>}]} {
    %c0 = arith.constant 0 : index
    %c0_0 = arith.constant 0 : index
    %0 = vector.load %arg1[%c0, %c0_0] : memref<32x128xf32, #tpu.memory_space<vmem>>, vector<32x128xf32>
    %c0_1 = arith.constant 0 : index
    %c0_2 = arith.constant 0 : index
    %1 = vector.load %arg2[%c0_1, %c0_2] : memref<32x128xf32, #tpu.memory_space<vmem>>, vector<32x128xf32>
    %c0_3 = arith.constant 0 : index
    %c0_4 = arith.constant 0 : index
    %2 = vector.load %arg3[%c0_3, %c0_4] : memref<32x128xf32, #tpu.memory_space<vmem>>, vector<32x128xf32>
    %3 = arith.subf %1, %2 : vector<32x128xf32>
    %4 = arith.mulf %0, %3 : vector<32x128xf32>
    %cst = arith.constant dense<0.000000e+00> : vector<128xf32>
    %5 = vector.multi_reduction <add>, %4, %cst [0] : vector<32x128xf32> to vector<128xf32>
    %6 = vector.shape_cast %5 : vector<128xf32> to vector<1x128xf32>
    %c0_5 = arith.constant 0 : index
    %c0_6 = arith.constant 0 : index
    %7 = vector.load %arg4[%c0_5, %c0_6] : memref<1x128xf32, #tpu.memory_space<vmem>>, vector<1x128xf32>
    tpu.vector_store %arg4[%c0_5, %c0_6], %6 {strides = array<i32>} : memref<1x128xf32, #tpu.memory_space<vmem>>, vector<1x128xf32>,
    return
  }
  func.func @transform_0(%arg0: i32) -> (i32, i32) {
    %c0_i32 = arith.constant 0 : i32
    %c0_i32_0 = arith.constant 0 : i32
    return %c0_i32, %arg0 : i32, i32
  }
  func.func @transform_1(%arg0: i32) -> (i32, i32) {
    %c0_i32 = arith.constant 0 : i32
    %c0_i32_0 = arith.constant 0 : i32
    return %c0_i32, %arg0 : i32, i32
  }
  func.func @transform_2(%arg0: i32) -> (i32, i32) {
    %c0_i32 = arith.constant 0 : i32
    %c0_i32_0 = arith.constant 0 : i32
    return %c0_i32, %arg0 : i32, i32
  }
  func.func @transform_3(%arg0: i32) -> (i32, i32) {
    %c0_i32 = arith.constant 0 : i32
    %c0_i32_0 = arith.constant 0 : i32
    return %c0_i32, %arg0 : i32, i32
  }
}

</mosaic_0001>

<llo_original>
// kernel: lgcn_forward.3
$region0: #{lgcn_forward.3}
  #allocation0 [shape = 'u32[]', space=smem, size = 0x4, offset = 0x4, fixed_abs, tag = 'smem constant byte address 0x4 - core index']
  #allocation1 [shape = 'u32[144,128]{1,0:T(1,128)}', space=vmem, size = 0x12000, scoped, tag = 'internal scratch']
  #allocation2 [shape = 'f32[128,32]{1,0:T(8,128)}', space=vmem, size = 0x10000, scoped, tag = 'scratch operand']
  %s0 = inlined_call_operand.vmem [shape: bf16[128,128], index: 0, kind: input, shape index: {}]
  %s1 = inlined_call_operand.vmem [shape: bf16[128,32], index: 1, kind: input, shape index: {}]
  %s2 = inlined_call_operand.vmem [shape: f32[128,32], index: 2, kind: output, shape index: {}]
  %s3 = sld [smem:[#allocation0]]
  $region26: #{lgcn_forward.3} parent=0
    _
  %s5 = ssub.s32 1, %s3
  %s6 = scalar_select 0, %s5, %s3
  // Predicated region
  $region2: #{lgcn_forward.3} parent=0 // pred_check
    _
  $region3: #{lgcn_forward.3} parent=0 // pred_check_branch
    %8 = sbr.rel (0) target = $region5
  $region4: #{lgcn_forward.3} parent=0 // pred_region
    _
  $region5: #{lgcn_forward.3} parent=0 // pred_fallthru
    _
  // Predicated region
  $region6: #{lgcn_forward.3} parent=0 // pred_check
    _
  $region7: #{lgcn_forward.3} parent=0 // pred_check_branch
    %10 = sbr.rel (0) target = $region9
  $region8: #{lgcn_forward.3} parent=0 // pred_region
    _
  $region9: #{lgcn_forward.3} parent=0 // pred_fallthru
    _
  %p12 = scmp.eq.s32.totalorder 0, 0
  // Predicated region
  $region10: #{lgcn_forward.3} parent=0 // pred_check
    %p13 = pneg %p12
  $region11: #{lgcn_forward.3} parent=0 // pred_check_branch
    %15 = sbr.rel (%p13) target = $region13
  $region12: #{lgcn_forward.3} parent=0 // pred_region
    %vm16 = vcmask 261120
    %17 = vst.msk [vmem:[#allocation2] sm:$0xff] %vm16, 0.0
    %18 = vst.msk [vmem:[#allocation2 + $0x8] sm:$0xff] %vm16, 0.0
    %19 = vst.msk [vmem:[#allocation2 + $0x10] sm:$0xff] %vm16, 0.0
    %20 = vst.msk [vmem:[#allocation2 + $0x18] sm:$0xff] %vm16, 0.0
    %21 = vst.msk [vmem:[#allocation2 + $0x20] sm:$0xff] %vm16, 0.0
    %22 = vst.msk [vmem:[#allocation2 + $0x28] sm:$0xff] %vm16, 0.0
    %23 = vst.msk [vmem:[#allocation2 + $0x30] sm:$0xff] %vm16, 0.0
    %24 = vst.msk [vmem:[#allocation2 + $0x38] sm:$0xff] %vm16, 0.0
    %25 = vst.msk [vmem:[#allocation2 + $0x40] sm:$0xff] %vm16, 0.0
    %26 = vst.msk [vmem:[#allocation2 + $0x48] sm:$0xff] %vm16, 0.0
    %27 = vst.msk [vmem:[#allocation2 + $0x50] sm:$0xff] %vm16, 0.0
    %28 = vst.msk [vmem:[#allocation2 + $0x58] sm:$0xff] %vm16, 0.0
    %29 = vst.msk [vmem:[#allocation2 + $0x60] sm:$0xff] %vm16, 0.0
    %30 = vst.msk [vmem:[#allocation2 + $0x68] sm:$0xff] %vm16, 0.0
    %31 = vst.msk [vmem:[#allocation2 + $0x70] sm:$0xff] %vm16, 0.0
    %32 = vst.msk [vmem:[#allocation2 + $0x78] sm:$0xff] %vm16, 0.0
  $region13: #{lgcn_forward.3} parent=0 // pred_fallthru
    _
  %v33 = vld [vmem:[#allocation2] sm:$0xff]
  %v34 = vld [vmem:[#allocation2 + $0x8] sm:$0xff]
  %v35 = vld [vmem:[#allocation2 + $0x10] sm:$0xff]
  %v36 = vld [vmem:[#allocation2 + $0x18] sm:$0xff]
  %v37 = vld [vmem:[#allocation2 + $0x20] sm:$0xff]
  %v38 = vld [vmem:[#allocation2 + $0x28] sm:$0xff]
  %v39 = vld [vmem:[#allocation2 + $0x30] sm:$0xff]
  %v40 = vld [vmem:[#allocation2 + $0x38] sm:$0xff]
  %v41 = vld [vmem:[#allocation2 + $0x40] sm:$0xff]
  %v42 = vld [vmem:[#allocation2 + $0x48] sm:$0xff]
  %v43 = vld [vmem:[#allocation2 + $0x50] sm:$0xff]
  %v44 = vld [vmem:[#allocation2 + $0x58] sm:$0xff]
  %v45 = vld [vmem:[#allocation2 + $0x60] sm:$0xff]
  %v46 = vld [vmem:[#allocation2 + $0x68] sm:$0xff]
  %v47 = vld [vmem:[#allocation2 + $0x70] sm:$0xff]
  %v48 = vld [vmem:[#allocation2 + $0x78] sm:$0xff]
  %v49 = vld [vmem:[%s0] sm:$0xf]
  %v50 = vld [vmem:[%s0 + $0x4] sm:$0xf]
  %v51 = vld [vmem:[%s0 + $0x8] sm:$0xf]
  %v52 = vld [vmem:[%s0 + $0xc] sm:$0xf]
  %v53 = vld [vmem:[%s0 + $0x10] sm:$0xf]
  %v54 = vld [vmem:[%s0 + $0x14] sm:$0xf]
  %v55 = vld [vmem:[%s0 + $0x18] sm:$0xf]
  %v56 = vld [vmem:[%s0 + $0x1c] sm:$0xf]
  %v57 = vld [vmem:[%s0 + $0x20] sm:$0xf]
  %v58 = vld [vmem:[%s0 + $0x24] sm:$0xf]
  %v59 = vld [vmem:[%s0 + $0x28] sm:$0xf]
  %v60 = vld [vmem:[%s0 + $0x2c] sm:$0xf]
  %v61 = vld [vmem:[%s0 + $0x30] sm:$0xf]
  %v62 = vld [vmem:[%s0 + $0x34] sm:$0xf]
  %v63 = vld [vmem:[%s0 + $0x38] sm:$0xf]
  %v64 = vld [vmem:[%s0 + $0x3c] sm:$0xf]
  %v65 = vld [vmem:[%s1] sm:$0xf]
  %v66 = vld [vmem:[%s1 + $0x4] sm:$0xf]
  %v67 = vld [vmem:[%s1 + $0x8] sm:$0xf]
  %v68 = vld [vmem:[%s1 + $0xc] sm:$0xf]
  %v69 = vld [vmem:[%s1 + $0x10] sm:$0xf]
  %v70 = vld [vmem:[%s1 + $0x14] sm:$0xf]
  %v71 = vld [vmem:[%s1 + $0x18] sm:$0xf]
  %v72 = vld [vmem:[%s1 + $0x1c] sm:$0xf]
  %v73 = vld [vmem:[%s1 + $0x20] sm:$0xf]
  %v74 = vld [vmem:[%s1 + $0x24] sm:$0xf]
  %v75 = vld [vmem:[%s1 + $0x28] sm:$0xf]
  %v76 = vld [vmem:[%s1 + $0x2c] sm:$0xf]
  %v77 = vld [vmem:[%s1 + $0x30] sm:$0xf]
  %v78 = vld [vmem:[%s1 + $0x34] sm:$0xf]
  %v79 = vld [vmem:[%s1 + $0x38] sm:$0xf]
  %v80 = vld [vmem:[%s1 + $0x3c] sm:$0xf]
  %v97 = vunpack.c.l.b16 %v49
  %v98 = vunpack.c.l.b16 %v50
  %v99 = vunpack.c.l.b16 %v51
  %v100 = vunpack.c.l.b16 %v52
  %v101 = vunpack.c.l.b16 %v53
  %v102 = vunpack.c.l.b16 %v54
  %v103 = vunpack.c.l.b16 %v55
  %v104 = vunpack.c.l.b16 %v56
  %v105 = vunpack.c.l.b16 %v57
  %v106 = vunpack.c.l.b16 %v58
  %v107 = vunpack.c.l.b16 %v59
  %v108 = vunpack.c.l.b16 %v60
  %v109 = vunpack.c.l.b16 %v61
  %v110 = vunpack.c.l.b16 %v62
  %v111 = vunpack.c.l.b16 %v63
  %v112 = vunpack.c.l.b16 %v64
  %v113 = vpack.c.b16 %v98, %v97
  %v114 = vpack.c.b16 %v100, %v99
  %v115 = vpack.c.b16 %v102, %v101
  %v116 = vpack.c.b16 %v104, %v103
  %v117 = vpack.c.b16 %v106, %v105
  %v118 = vpack.c.b16 %v108, %v107
  %v119 = vpack.c.b16 %v110, %v109
  %v120 = vpack.c.b16 %v112, %v111
  %v145 = vunpack.c.l.b16 %v65
  %v146 = vunpack.c.l.b16 %v66
  %v147 = vunpack.c.l.b16 %v67
  %v148 = vunpack.c.l.b16 %v68
  %v149 = vunpack.c.l.b16 %v69
  %v150 = vunpack.c.l.b16 %v70
  %v151 = vunpack.c.l.b16 %v71
  %v152 = vunpack.c.l.b16 %v72
  %v153 = vunpack.c.l.b16 %v73
  %v154 = vunpack.c.l.b16 %v74
  %v155 = vunpack.c.l.b16 %v75
  %v156 = vunpack.c.l.b16 %v76
  %v157 = vunpack.c.l.b16 %v77
  %v158 = vunpack.c.l.b16 %v78
  %v159 = vunpack.c.l.b16 %v79
  %v160 = vunpack.c.l.b16 %v80
  %v161 = vpack.c.b16 %v146, %v145
  %v162 = vpack.c.b16 %v148, %v147
  %v163 = vpack.c.b16 %v150, %v149
  %v164 = vpack.c.b16 %v152, %v151
  %v165 = vpack.c.b16 %v154, %v153
  %v166 = vpack.c.b16 %v156, %v155
  %v167 = vpack.c.b16 %v158, %v157
  %v168 = vpack.c.b16 %v160, %v159
  %177 = vmatprep.subr.bf16.mxu0 0
  %178 = vmatpush1.bf16.msra.mxu0 %v161
  %179 = vmatprep.subr.bf16.mxu0 0
  %180 = vmatpush1.bf16.msra.mxu0 %v162
  %181 = vmatprep.subr.bf16.mxu0 0
  %182 = vmatpush1.bf16.msra.mxu0 %v163
  %183 = vmatprep.subr.bf16.mxu0 0
  %184 = vmatpush1.bf16.msra.mxu0 %v164
  %185 = vmatprep.subr.bf16.mxu0 0
  %186 = vmatpush1.bf16.msra.mxu0 %v165
  %187 = vmatprep.subr.bf16.mxu0 0
  %188 = vmatpush1.bf16.msra.mxu0 %v166
  %189 = vmatprep.subr.bf16.mxu0 0
  %190 = vmatpush1.bf16.msra.mxu0 %v167
  %191 = vmatprep.subr.bf16.mxu0 0
  %192 = vmatpush1.bf16.msra.mxu0 %v168
  %193 = vmatprep.subr.bf16.mxu0 0
  %194 = vmatpush1.bf16.msra.mxu0 0
  %195 = vmatprep.subr.bf16.mxu0 0
  %196 = vmatpush1.bf16.msra.mxu0 0
  %197 = vmatprep.subr.bf16.mxu0 0
  %198 = vmatpush1.bf16.msra.mxu0 0
  %199 = vmatprep.subr.bf16.mxu0 0
  %200 = vmatpush1.bf16.msra.mxu0 0
  %201 = vmatprep.subr.bf16.mxu0 0
  %202 = vmatpush1.bf16.msra.mxu0 0
  %203 = vmatprep.subr.bf16.mxu0 0
  %204 = vmatpush1.bf16.msra.mxu0 0
  %205 = vmatprep.subr.bf16.mxu0 0
  %206 = vmatpush1.bf16.msra.mxu0 0
  %207 = vmatprep.subr.bf16.mxu0 0
  %208 = vmatpush1.bf16.msra.mxu0 0
  %209 = vmatprep.mubr.bf16.mxu0 0
  %210 = vmatmul.mubr.bf16.gmra.mrb[0].mxu0 %v113
  %v211 = vpop.f32.mrb[0].mxu0
  %v212 = vadd.f32 0.0, %v211
  %v213 = vpop.f32.mrb[0].mxu0
  %v214 = vpop.f32.mrb[0].mxu0
  %v215 = vadd.f32 0.0, %v214
  %v216 = vpop.f32.mrb[0].mxu0
  %217 = vmatprep.mubr.bf16.mxu0 0
  %218 = vmatmul.mubr.bf16.gmra.mrb[0].mxu0 %v114
  %v219 = vpop.f32.mrb[0].mxu0
  %v220 = vadd.f32 0.0, %v219
  %v221 = vpop.f32.mrb[0].mxu0
  %v222 = vpop.f32.mrb[0].mxu0
  %v223 = vadd.f32 0.0, %v222
  %v224 = vpop.f32.mrb[0].mxu0
  %225 = vmatprep.mubr.bf16.mxu0 0
  %226 = vmatmul.mubr.bf16.gmra.mrb[0].mxu0 %v115
  %v227 = vpop.f32.mrb[0].mxu0
  %v228 = vadd.f32 0.0, %v227
  %v229 = vpop.f32.mrb[0].mxu0
  %v230 = vpop.f32.mrb[0].mxu0
  %v231 = vadd.f32 0.0, %v230
  %v232 = vpop.f32.mrb[0].mxu0
  %233 = vmatprep.mubr.bf16.mxu0 0
  %234 = vmatmul.mubr.bf16.gmra.mrb[0].mxu0 %v116
  %v235 = vpop.f32.mrb[0].mxu0
  %v236 = vadd.f32 0.0, %v235
  %v237 = vpop.f32.mrb[0].mxu0
  %v238 = vpop.f32.mrb[0].mxu0
  %v239 = vadd.f32 0.0, %v238
  %v240 = vpop.f32.mrb[0].mxu0
  %241 = vmatprep.mubr.bf16.mxu0 0
  %242 = vmatmul.mubr.bf16.gmra.mrb[0].mxu0 %v117
  %v243 = vpop.f32.mrb[0].mxu0
  %v244 = vadd.f32 0.0, %v243
  %v245 = vpop.f32.mrb[0].mxu0
  %v246 = vpop.f32.mrb[0].mxu0
  %v247 = vadd.f32 0.0, %v246
  %v248 = vpop.f32.mrb[0].mxu0
  %249 = vmatprep.mubr.bf16.mxu0 0
  %250 = vmatmul.mubr.bf16.gmra.mrb[0].mxu0 %v118
  %v251 = vpop.f32.mrb[0].mxu0
  %v252 = vadd.f32 0.0, %v251
  %v253 = vpop.f32.mrb[0].mxu0
  %v254 = vpop.f32.mrb[0].mxu0
  %v255 = vadd.f32 0.0, %v254
  %v256 = vpop.f32.mrb[0].mxu0
  %257 = vmatprep.mubr.bf16.mxu0 0
  %258 = vmatmul.mubr.bf16.gmra.mrb[0].mxu0 %v119
  %v259 = vpop.f32.mrb[0].mxu0
  %v260 = vadd.f32 0.0, %v259
  %v261 = vpop.f32.mrb[0].mxu0
  %v262 = vpop.f32.mrb[0].mxu0
  %v263 = vadd.f32 0.0, %v262
  %v264 = vpop.f32.mrb[0].mxu0
  %265 = vmatprep.mubr.bf16.mxu0 0
  %266 = vmatmul.mubr.bf16.gmra.mrb[0].mxu0 %v120
  %v267 = vpop.f32.mrb[0].mxu0
  %v268 = vadd.f32 0.0, %v267
  %v269 = vpop.f32.mrb[0].mxu0
  %v270 = vpop.f32.mrb[0].mxu0
  %v271 = vadd.f32 0.0, %v270
  %v272 = vpop.f32.mrb[0].mxu0
  %273 = vdwg.mxu0
  %v274 = vadd.f32 %v33, %v212
  %v275 = vadd.f32 %v34, %v215
  %v276 = vadd.f32 %v35, %v220
  %v277 = vadd.f32 %v36, %v223
  %v278 = vadd.f32 %v37, %v228
  %v279 = vadd.f32 %v38, %v231
  %v280 = vadd.f32 %v39, %v236
  %v281 = vadd.f32 %v40, %v239
  %v282 = vadd.f32 %v41, %v244
  %v283 = vadd.f32 %v42, %v247
  %v284 = vadd.f32 %v43, %v252
  %v285 = vadd.f32 %v44, %v255
  %v286 = vadd.f32 %v45, %v260
  %v287 = vadd.f32 %v46, %v263
  %v288 = vadd.f32 %v47, %v268
  %v289 = vadd.f32 %v48, %v271
  %vm290 = vcmask 261120
  %291 = vst.msk [vmem:[#allocation2] sm:$0xff] %vm290, %v274
  %292 = vst.msk [vmem:[#allocation2 + $0x8] sm:$0xff] %vm290, %v275
  %293 = vst.msk [vmem:[#allocation2 + $0x10] sm:$0xff] %vm290, %v276
  %294 = vst.msk [vmem:[#allocation2 + $0x18] sm:$0xff] %vm290, %v277
  %295 = vst.msk [vmem:[#allocation2 + $0x20] sm:$0xff] %vm290, %v278
  %296 = vst.msk [vmem:[#allocation2 + $0x28] sm:$0xff] %vm290, %v279
  %297 = vst.msk [vmem:[#allocation2 + $0x30] sm:$0xff] %vm290, %v280
  %298 = vst.msk [vmem:[#allocation2 + $0x38] sm:$0xff] %vm290, %v281
  %299 = vst.msk [vmem:[#allocation2 + $0x40] sm:$0xff] %vm290, %v282
  %300 = vst.msk [vmem:[#allocation2 + $0x48] sm:$0xff] %vm290, %v283
  %301 = vst.msk [vmem:[#allocation2 + $0x50] sm:$0xff] %vm290, %v284
  %302 = vst.msk [vmem:[#allocation2 + $0x58] sm:$0xff] %vm290, %v285
  %303 = vst.msk [vmem:[#allocation2 + $0x60] sm:$0xff] %vm290, %v286
  %304 = vst.msk [vmem:[#allocation2 + $0x68] sm:$0xff] %vm290, %v287
  %305 = vst.msk [vmem:[#allocation2 + $0x70] sm:$0xff] %vm290, %v288
  %306 = vst.msk [vmem:[#allocation2 + $0x78] sm:$0xff] %vm290, %v289
  // Predicated region
  $region14: #{lgcn_forward.3} parent=0 // pred_check
    %p307 = pneg %p12
  $region15: #{lgcn_forward.3} parent=0 // pred_check_branch
    %309 = sbr.rel (%p307) target = $region17
  $region16: #{lgcn_forward.3} parent=0 // pred_region
    %v310 = vld [vmem:[#allocation2] sm:$0xff]
    %v311 = vld [vmem:[#allocation2 + $0x8] sm:$0xff]
    %v312 = vld [vmem:[#allocation2 + $0x10] sm:$0xff]
    %v313 = vld [vmem:[#allocation2 + $0x18] sm:$0xff]
    %v314 = vld [vmem:[#allocation2 + $0x20] sm:$0xff]
    %v315 = vld [vmem:[#allocation2 + $0x28] sm:$0xff]
    %v316 = vld [vmem:[#allocation2 + $0x30] sm:$0xff]
    %v317 = vld [vmem:[#allocation2 + $0x38] sm:$0xff]
    %v318 = vld [vmem:[#allocation2 + $0x40] sm:$0xff]
    %v319 = vld [vmem:[#allocation2 + $0x48] sm:$0xff]
    %v320 = vld [vmem:[#allocation2 + $0x50] sm:$0xff]
    %v321 = vld [vmem:[#allocation2 + $0x58] sm:$0xff]
    %v322 = vld [vmem:[#allocation2 + $0x60] sm:$0xff]
    %v323 = vld [vmem:[#allocation2 + $0x68] sm:$0xff]
    %v324 = vld [vmem:[#allocation2 + $0x70] sm:$0xff]
    %v325 = vld [vmem:[#allocation2 + $0x78] sm:$0xff]
    %326 = vst.msk [vmem:[%s2] sm:$0xff] %vm290, %v310
    %327 = vst.msk [vmem:[%s2 + $0x8] sm:$0xff] %vm290, %v311
    %328 = vst.msk [vmem:[%s2 + $0x10] sm:$0xff] %vm290, %v312
    %329 = vst.msk [vmem:[%s2 + $0x18] sm:$0xff] %vm290, %v313
    %330 = vst.msk [vmem:[%s2 + $0x20] sm:$0xff] %vm290, %v314
    %331 = vst.msk [vmem:[%s2 + $0x28] sm:$0xff] %vm290, %v315
    %332 = vst.msk [vmem:[%s2 + $0x30] sm:$0xff] %vm290, %v316
    %333 = vst.msk [vmem:[%s2 + $0x38] sm:$0xff] %vm290, %v317
    %334 = vst.msk [vmem:[%s2 + $0x40] sm:$0xff] %vm290, %v318
    %335 = vst.msk [vmem:[%s2 + $0x48] sm:$0xff] %vm290, %v319
    %336 = vst.msk [vmem:[%s2 + $0x50] sm:$0xff] %vm290, %v320
    %337 = vst.msk [vmem:[%s2 + $0x58] sm:$0xff] %vm290, %v321
    %338 = vst.msk [vmem:[%s2 + $0x60] sm:$0xff] %vm290, %v322
    %339 = vst.msk [vmem:[%s2 + $0x68] sm:$0xff] %vm290, %v323
    %340 = vst.msk [vmem:[%s2 + $0x70] sm:$0xff] %vm290, %v324
    %341 = vst.msk [vmem:[%s2 + $0x78] sm:$0xff] %vm290, %v325
  $region17: #{lgcn_forward.3} parent=0 // pred_fallthru
    _
  // Predicated region
  $region18: #{lgcn_forward.3} parent=0 // pred_check
    _
  $region19: #{lgcn_forward.3} parent=0 // pred_check_branch
    %343 = sbr.rel (0) target = $region21
  $region20: #{lgcn_forward.3} parent=0 // pred_region
    _
  $region21: #{lgcn_forward.3} parent=0 // pred_fallthru
    _
  // Predicated region
  $region22: #{lgcn_forward.3} parent=0 // pred_check
    _
  $region23: #{lgcn_forward.3} parent=0 // pred_check_branch
    %345 = sbr.rel (0) target = $region25
  $region24: #{lgcn_forward.3} parent=0 // pred_region
    _
  $region25: #{lgcn_forward.3} parent=0 // pred_fallthru
    _

// kernel: lgcn_forward.5
$region0: #{lgcn_forward.5}
  #allocation0 [shape = 'u32[]', space=smem, size = 0x4, offset = 0x4, fixed_abs, tag = 'smem constant byte address 0x4 - core index']
  #allocation1 [shape = 'u32[144,128]{1,0:T(1,128)}', space=vmem, size = 0x12000, scoped, tag = 'internal scratch']
  %s0 = inlined_call_operand.vmem [shape: f32[32,128], index: 0, kind: input, shape index: {}]
  %s1 = inlined_call_operand.vmem [shape: f32[32,128], index: 1, kind: input, shape index: {}]
  %s2 = inlined_call_operand.vmem [shape: f32[32,128], index: 2, kind: input, shape index: {}]
  %s3 = inlined_call_operand.vmem [shape: f32[1,128], index: 3, kind: output, shape index: {}]
  %s4 = sld [smem:[#allocation0]]
  $region22: #{lgcn_forward.5} parent=0
    _
  %s6 = ssub.s32 1, %s4
  %s7 = scalar_select 0, %s6, %s4
  // Predicated region
  $region2: #{lgcn_forward.5} parent=0 // pred_check
    _
  $region3: #{lgcn_forward.5} parent=0 // pred_check_branch
    %9 = sbr.rel (0) target = $region5
  $region4: #{lgcn_forward.5} parent=0 // pred_region
    _
  $region5: #{lgcn_forward.5} parent=0 // pred_fallthru
    _
  // Predicated region
  $region6: #{lgcn_forward.5} parent=0 // pred_check
    _
  $region7: #{lgcn_forward.5} parent=0 // pred_check_branch
    %11 = sbr.rel (0) target = $region9
  $region8: #{lgcn_forward.5} parent=0 // pred_region
    _
  $region9: #{lgcn_forward.5} parent=0 // pred_fallthru
    _
  // Predicated region
  $region10: #{lgcn_forward.5} parent=0 // pred_check
    _
  $region11: #{lgcn_forward.5} parent=0 // pred_check_branch
    %13 = sbr.rel (0) target = $region13
  $region12: #{lgcn_forward.5} parent=0 // pred_region
    _
  $region13: #{lgcn_forward.5} parent=0 // pred_fallthru
    _
  %v14 = vld [vmem:[%s0] sm:$0xff]
  %v15 = vld [vmem:[%s0 + $0x8] sm:$0xff]
  %v16 = vld [vmem:[%s0 + $0x10] sm:$0xff]
  %v17 = vld [vmem:[%s0 + $0x18] sm:$0xff]
  %v18 = vld [vmem:[%s1] sm:$0xff]
  %v19 = vld [vmem:[%s1 + $0x8] sm:$0xff]
  %v20 = vld [vmem:[%s1 + $0x10] sm:$0xff]
  %v21 = vld [vmem:[%s1 + $0x18] sm:$0xff]
  %v22 = vld [vmem:[%s2] sm:$0xff]
  %v23 = vld [vmem:[%s2 + $0x8] sm:$0xff]
  %v24 = vld [vmem:[%s2 + $0x10] sm:$0xff]
  %v25 = vld [vmem:[%s2 + $0x18] sm:$0xff]
  %v26 = vsub.f32 %v18, %v22
  %v27 = vsub.f32 %v19, %v23
  %v28 = vsub.f32 %v20, %v24
  %v29 = vsub.f32 %v21, %v25
  %v30 = vmul.f32 %v14, %v26
  %v31 = vmul.f32 %v15, %v27
  %v32 = vmul.f32 %v16, %v28
  %v33 = vmul.f32 %v17, %v29
  %v34 = vadd.f32 %v30, %v31
  %v35 = vadd.f32 %v34, %v32
  %v36 = vadd.f32 %v35, %v33
  %v37 = vrot.slane %v36, 4
  %v38 = vadd.f32 %v36, %v37
  %v39 = vrot.slane %v38, 2
  %v40 = vadd.f32 %v38, %v39
  %v41 = vrot.slane %v40, 1
  %v42 = vadd.f32 %v40, %v41
  %43 = vst [vmem:[%s3] sm:$0x1] %v42
  // Predicated region
  $region14: #{lgcn_forward.5} parent=0 // pred_check
    _
  $region15: #{lgcn_forward.5} parent=0 // pred_check_branch
    %45 = sbr.rel (0) target = $region17
  $region16: #{lgcn_forward.5} parent=0 // pred_region
    _
  $region17: #{lgcn_forward.5} parent=0 // pred_fallthru
    _
  // Predicated region
  $region18: #{lgcn_forward.5} parent=0 // pred_check
    _
  $region19: #{lgcn_forward.5} parent=0 // pred_check_branch
    %47 = sbr.rel (0) target = $region21
  $region20: #{lgcn_forward.5} parent=0 // pred_region
    _
  $region21: #{lgcn_forward.5} parent=0 // pred_fallthru
    _

</llo_original>
